<compile_context>
chip_gen: v5e
topology: v5e:2x2
jax: 0.10.0
libtpu: 0.0.40
codegen_flags: <defaults>
</compile_context>

<pallas_src>
import jax
import jax.numpy as jnp
from jax.experimental import pallas as pl
from jax.experimental.pallas import tpu as pltpu


_LANE = 1024                      # lane-dense slab width (multiple of 128)
_MAX_BLOCK_ROWS = 1024            # 1024*1024*4 B = 4 MiB f32 block
_MIN_PALLAS_ELEMS = 256 * 1024    # below ~1 MiB of data, XLA fusion wins
_VMEM_LIMIT_BYTES = 32 * 1024 * 1024


def _round_up(x, m):
    return ((x + m - 1) // m) * m


def _linear11_kernel(w_ref, b_ref, x_ref, o_ref):
    # w_ref/b_ref: (1, 1) f32 scalars in SMEM.
    # x_ref/o_ref: (block_rows, _LANE) lane-dense tiles in VMEM.
    # One fused mul-add per vreg on the VPU; accumulate in f32, store in the
    # I/O dtype (no-op cast for f32, downcast for bf16).
    y = x_ref[...].astype(jnp.float32) * w_ref[0, 0] + b_ref[0, 0]
    o_ref[...] = y.astype(o_ref.dtype)


def _linear11_pallas_2d(x2d, w, b):
    """Run y = x*w + b over an already lane-dense (rows, _LANE) slab."""
    rows, lane = x2d.shape
    row_mult = 8 if x2d.dtype == jnp.float32 else 16  # sublane tiling (f32 / bf16)

    # Aim for >= ~4 grid steps (pipelining + both v7x TensorCores), while
    # capping the block at _MAX_BLOCK_ROWS (4 MiB f32).
    block_rows = min(_MAX_BLOCK_ROWS,
                     max(row_mult, _round_up(pl.cdiv(rows, 4), row_mult)))
    grid = (pl.cdiv(rows, block_rows),)  # partial last block is masked by Pallas

    n = rows * lane
    itemsize = jnp.dtype(x2d.dtype).itemsize
    cost = pl.CostEstimate(flops=2 * n,
                           transcendentals=0,
                           bytes_accessed=2 * n * itemsize)

    return pl.pallas_call(
        _linear11_kernel,
        out_shape=jax.ShapeDtypeStruct((rows, lane), x2d.dtype),
        grid_spec=pl.GridSpec(
            grid=grid,
            in_specs=[
                pl.BlockSpec(memory_space=pltpu.SMEM),                # weight (1,1)
                pl.BlockSpec(memory_space=pltpu.SMEM),                # bias   (1,1)
                pl.BlockSpec((block_rows, lane), lambda i: (i, 0)),   # x tile
            ],
            out_specs=pl.BlockSpec((block_rows, lane), lambda i: (i, 0)),
        ),
        compiler_params=pltpu.CompilerParams(
            dimension_semantics=("parallel",),
            vmem_limit_bytes=_VMEM_LIMIT_BYTES,
        ),
        cost_estimate=cost,
    )(w, b, x2d)


def wins_regression_forward(x, weight, bias, *, min_pallas_elems=_MIN_PALLAS_ELEMS):
    """Forward pass of Wins_Regression (Linear(1, 1)): y = x * w + b.

    x:      (..., 1) float32 or bfloat16 (PyTorch Linear input convention)
    weight: (1, 1)   (torch Linear.weight, shape (out, in))
    bias:   (1,)     (torch Linear.bias)
    returns same shape and (f32/bf16) dtype as x.
    """
    orig_shape = x.shape
    n = x.size

    io_dtype = x.dtype if x.dtype in (jnp.float32, jnp.bfloat16) else jnp.float32
    xf = x.reshape(-1).astype(io_dtype)
    w = weight.reshape(1, 1).astype(jnp.float32)
    b = bias.reshape(1, 1).astype(jnp.float32)

    if n < max(min_pallas_elems, _LANE):
        # Small batch: launch/grid overhead dwarfs the mul-add; XLA fuses this
        # into a single memory-bound op already at roofline.
        y = xf.astype(jnp.float32) * w[0, 0] + b[0, 0]
        return y.astype(io_dtype).reshape(orig_shape)

    # Lane-dense main slab (free bitcast reshape, no padding) + tiny tail.
    n_main = (n // _LANE) * _LANE
    x2d = xf[:n_main].reshape(n_main // _LANE, _LANE)
    y_main = _linear11_pallas_2d(x2d, w, b).reshape(-1)

    if n_main == n:
        return y_main.reshape(orig_shape)

    # Ragged tail (< 1024 elements): handled by plain JAX instead of padding
    # and re-slicing the whole slab.
    tail = xf[n_main:]
    y_tail = (tail.astype(jnp.float32) * w[0, 0] + b[0, 0]).astype(io_dtype)
    return jnp.concatenate([y_main, y_tail]).reshape(orig_shape)


if __name__ == "__main__":
    key = jax.random.PRNGKey(0)
    kx, kw, kb, kx2 = jax.random.split(key, 4)

    # Deterministic synthetic parameters (torch Linear(1,1) shapes).
    weight = jax.random.uniform(kw, (1, 1), jnp.float32, minval=-1.0, maxval=1.0)
    bias = jax.random.uniform(kb, (1,), jnp.float32, minval=-1.0, maxval=1.0)

    # Moderate batch: 70 aligned 1024-wide rows (multi-step grid with a masked
    # partial last block) plus a ragged 300-element tail.  min_pallas_elems is
    # overridden so this demo actually exercises the Pallas path; the
    # production default routes anything below ~256K elements to plain JAX.
    n = 70 * _LANE + 300
    x = jax.random.normal(kx, (n, 1), jnp.float32)
    out = jax.block_until_ready(
        wins_regression_forward(x, weight, bias, min_pallas_elems=1))

    ref = x @ weight.T + bias
    assert out.shape == (n, 1)
    assert out.dtype == jnp.float32
    assert jnp.allclose(out, ref, atol=1e-5), (out[:4], ref[:4])

    # Tiny batch goes through the plain-JAX fast path (kernel not worth it).
    x_small = jax.random.normal(kx2, (8, 1), jnp.float32)
    out_small = jax.block_until_ready(
        wins_regression_forward(x_small, weight, bias))
    ref_small = x_small @ weight.T + bias
    assert out_small.shape == (8, 1)
    assert jnp.allclose(out_small, ref_small, atol=1e-6), (out_small, ref_small)

    print("KERNEL_OK")
</pallas_src>

<mosaic_0001>
module attributes {stable_mosaic.version = 11 : i64} {
  func.func @_linear11_kernel(%arg0: i32, %arg1: memref<1x1xf32, #tpu.memory_space<smem>>, %arg2: memref<1x1xf32, #tpu.memory_space<smem>>, %arg3: memref<24x1024xf32, #tpu.memory_space<vmem>>, %arg4: memref<24x1024xf32, #tpu.memory_space<vmem>>) attributes {dimension_semantics = [#tpu.dimension_semantics<parallel>], iteration_bounds = array<i64: 3>, scalar_prefetch = 0 : i64, scratch_operands = 0 : i64, tpu.core_type = #tpu.core_type<tc>, window_params = [{transform_indices = @transform_0, window_bounds = array<i64: 1, 1>}, {transform_indices = @transform_1, window_bounds = array<i64: 1, 1>}, {transform_indices = @transform_2, window_bounds = array<i64: 24, 1024>}, {transform_indices = @transform_3, window_bounds = array<i64: 24, 1024>}]} {
    %c0 = arith.constant 0 : index
    %c0_0 = arith.constant 0 : index
    %0 = vector.load %arg3[%c0, %c0_0] : memref<24x1024xf32, #tpu.memory_space<vmem>>, vector<24x1024xf32>
    %c0_1 = arith.constant 0 : index
    %c0_2 = arith.constant 0 : index
    %1 = memref.load %arg1[%c0_1, %c0_2] : memref<1x1xf32, #tpu.memory_space<smem>>
    %2 = vector.broadcast %1 : f32 to vector<24x1024xf32>
    %3 = arith.mulf %0, %2 : vector<24x1024xf32>
    %c0_3 = arith.constant 0 : index
    %c0_4 = arith.constant 0 : index
    %4 = memref.load %arg2[%c0_3, %c0_4] : memref<1x1xf32, #tpu.memory_space<smem>>
    %5 = vector.broadcast %4 : f32 to vector<24x1024xf32>
    %6 = arith.addf %3, %5 : vector<24x1024xf32>
    %c0_5 = arith.constant 0 : index
    %c0_6 = arith.constant 0 : index
    %7 = vector.load %arg4[%c0_5, %c0_6] : memref<24x1024xf32, #tpu.memory_space<vmem>>, vector<24x1024xf32>
    tpu.vector_store %arg4[%c0_5, %c0_6], %6 {strides = array<i32>} : memref<24x1024xf32, #tpu.memory_space<vmem>>, vector<24x1024xf32>,
    return
  }
  func.func @transform_0(%arg0: i32) -> (i32, i32) {
    %c0_i32 = arith.constant 0 : i32
    %c0_i32_0 = arith.constant 0 : i32
    %c0_i32_1 = arith.constant 0 : i32
    return %c0_i32, %c0_i32_0 : i32, i32
  }
  func.func @transform_1(%arg0: i32) -> (i32, i32) {
    %c0_i32 = arith.constant 0 : i32
    %c0_i32_0 = arith.constant 0 : i32
    %c0_i32_1 = arith.constant 0 : i32
    return %c0_i32, %c0_i32_0 : i32, i32
  }
  func.func @transform_2(%arg0: i32) -> (i32, i32) {
    %c0_i32 = arith.constant 0 : i32
    %c0_i32_0 = arith.constant 0 : i32
    return %arg0, %c0_i32 : i32, i32
  }
  func.func @transform_3(%arg0: i32) -> (i32, i32) {
    %c0_i32 = arith.constant 0 : i32
    %c0_i32_0 = arith.constant 0 : i32
    return %arg0, %c0_i32 : i32, i32
  }
}

</mosaic_0001>

<llo_original>
// kernel: tpu_custom_call.1
$region0: #{tpu_custom_call.1}
  #allocation0 [shape = 'u32[]', space=smem, size = 0x4, offset = 0x4, fixed_abs, tag = 'smem constant byte address 0x4 - core index']
  #allocation1 [shape = 'u32[72,128]{1,0:T(1,128)}', space=vmem, size = 0x9000, scoped, tag = 'internal scratch']
  #allocation2 [shape = 'f32[1,1]{1,0:T(1,128)S(6)}', space=smem, size = 0x200, scoped, tag = 'scoped memory for tpu_custom_call.1']
  #allocation3 [shape = 'f32[1,1]{1,0:T(1,128)S(6)}', space=smem, size = 0x200, scoped, tag = 'scoped memory for tpu_custom_call.1']
  %s0 = inlined_call_operand.<no memory space> [shape: f32[1,1], index: 0, kind: input, shape index: {}]
  %s1 = inlined_call_operand.<no memory space> [shape: f32[1,1], index: 1, kind: input, shape index: {}]
  %s2 = inlined_call_operand.hbm [shape: f32[70,1024], index: 2, kind: input, shape index: {}]
  %s3 = inlined_call_operand.hbm [shape: f32[70,1024], index: 3, kind: output, shape index: {}]
  %s4 = sld [smem:[#allocation0]]
  $region49: #{tpu_custom_call.1} parent=0
    _
  %s6 = ssub.s32 1, %s4
  %s7 = scalar_select 0, %s6, %s4
  %8 = sst [smem:[#allocation2]] %s0
  %9 = sst [smem:[#allocation3]] %s1
  $region1: #{tpu_custom_call.1} parent=0
    #allocation4 [shape = 'u8[196608]{0}', space=vmem, size = 0x30000, scoped, tag = 'input window, operand 2']
    #allocation5 [shape = 's32[2]{0}', space=sflag, size = 0x8, scoped, tag = 'scoped memory for tpu_custom_call.1']
    #allocation6 [shape = 's32[2]{0}', space=sflag, size = 0x8, scoped, tag = 'scoped memory for tpu_custom_call.1']
    #allocation7 [shape = 'u8[196608]{0}', space=vmem, size = 0x30000, scoped, tag = 'output window, operand 0']
    %10 = vsyncpa [#allocation5], 0
    %s11 = scalar_lea.sflag [#allocation5], 1
    %12 = vsyncpa %s11, 0
    %13 = vsyncpa [#allocation6], 0
    %s14 = scalar_lea.sflag [#allocation6], 1
    %15 = vsyncpa %s14, 0
    loop: start=0, step=1, limit=5
    $region2: #{tpu_custom_call.1} parent=1 // loop_pre_header
      _
    $region3: #{tpu_custom_call.1} parent=1 // loop_header
      %s17 = sphi 0, %s21
      %p18 = scmp.ge.s32.totalorder %s17, 5
      %s25 = sphi 0, %s25
      %s27 = sphi 0, %s25
      %s28 = sphi 0, %s27
      %s42 = sphi 0, %s28
      %s46 = sphi 0, %s46
      %s48 = sphi 0, %s46
      %s49 = sphi 0, %s48
      %s63 = sphi 0, %s49
      %s69 = sphi 0, %s71
      %s72 = sphi 0, %s69
      %s73 = sphi 0, %s72
      %s89 = sphi 0, %s73
      %s95 = sphi 0, %s97
      %s98 = sphi 0, %s95
      %s99 = sphi 0, %s98
      %s115 = sphi 0, %s99
    $region4: #{tpu_custom_call.1} parent=1 // loop_header_branch
      %20 = sbr.rel (%p18) target = $region8
    $region5: #{tpu_custom_call.1} parent=1 // loop_body
      %s22 = ssub.s32 %s17, 1
      %s23 = ssub.s32 %s17, 2
      %s24 = sadd.s32 %s17, 1
      %s26 = sadd.s32 %s25, 1
      %p29 = scmp.eq.s32.totalorder %s17, 2
      %p30 = scmp.ne.s32.totalorder %s25, %s27
      %p31 = scmp.eq.s32.totalorder %s17, 0
      %p32 = por %p30, %p31
      %p33 = scmp.ne.s32.totalorder %s25, %s27
      %p34 = scmp.eq.s32.totalorder %s22, 2
      %p35 = por %p33, %p34
      %p36 = scmp.ne.s32.totalorder %s27, %s28
      %p37 = scmp.eq.s32.totalorder %s22, 0
      %p38 = por %p36, %p37
      %p39 = scmp.ne.s32.totalorder %s27, %s28
      %p40 = scmp.eq.s32.totalorder %s23, 2
      %p41 = por %p39, %p40
      %p43 = scmp.ne.s32.totalorder %s28, %s42
      %p44 = scmp.eq.s32.totalorder %s23, 0
      %p45 = por %p43, %p44
      %s47 = sadd.s32 %s46, 1
      %p50 = scmp.eq.s32.totalorder %s17, 2
      %p51 = scmp.ne.s32.totalorder %s46, %s48
      %p52 = scmp.eq.s32.totalorder %s17, 0
      %p53 = por %p51, %p52
      %p54 = scmp.ne.s32.totalorder %s46, %s48
      %p55 = scmp.eq.s32.totalorder %s22, 2
      %p56 = por %p54, %p55
      %p57 = scmp.ne.s32.totalorder %s48, %s49
      %p58 = scmp.eq.s32.totalorder %s22, 0
      %p59 = por %p57, %p58
      %p60 = scmp.ne.s32.totalorder %s48, %s49
      %p61 = scmp.eq.s32.totalorder %s23, 2
      %p62 = por %p60, %p61
      %p64 = scmp.ne.s32.totalorder %s49, %s63
      %p65 = scmp.eq.s32.totalorder %s23, 0
      %p66 = por %p64, %p65
      %s67 = ssub.s32 %s17, %s24
      %p68 = scmp.eq.s32.totalorder %s67, 0
      %s70 = sadd.s32 %s69, 1
      %s71 = scalar_select %p68, %s69, %s70
      %p74 = pneg %p68
      %p75 = scmp.eq.s32.totalorder %s17, 2
      %p76 = por %p74, %p75
      %p77 = scmp.ne.s32.totalorder %s69, %s72
      %p78 = scmp.eq.s32.totalorder %s17, 0
      %p79 = por %p77, %p78
      %p80 = scmp.ne.s32.totalorder %s69, %s72
      %p81 = scmp.eq.s32.totalorder %s22, 2
      %p82 = por %p80, %p81
      %p83 = scmp.ne.s32.totalorder %s72, %s73
      %p84 = scmp.eq.s32.totalorder %s22, 0
      %p85 = por %p83, %p84
      %p86 = scmp.ne.s32.totalorder %s72, %s73
      %p87 = scmp.eq.s32.totalorder %s23, 2
      %p88 = por %p86, %p87
      %p90 = scmp.ne.s32.totalorder %s73, %s89
      %p91 = scmp.eq.s32.totalorder %s23, 0
      %p92 = por %p90, %p91
      %s93 = ssub.s32 %s17, %s24
      %p94 = scmp.eq.s32.totalorder %s93, 0
      %s96 = sadd.s32 %s95, 1
      %s97 = scalar_select %p94, %s95, %s96
      %p100 = pneg %p94
      %p101 = scmp.eq.s32.totalorder %s17, 2
      %p102 = por %p100, %p101
      %p103 = scmp.ne.s32.totalorder %s95, %s98
      %p104 = scmp.eq.s32.totalorder %s17, 0
      %p105 = por %p103, %p104
      %p106 = scmp.ne.s32.totalorder %s95, %s98
      %p107 = scmp.eq.s32.totalorder %s22, 2
      %p108 = por %p106, %p107
      %p109 = scmp.ne.s32.totalorder %s98, %s99
      %p110 = scmp.eq.s32.totalorder %s22, 0
      %p111 = por %p109, %p110
      %p112 = scmp.ne.s32.totalorder %s98, %s99
      %p113 = scmp.eq.s32.totalorder %s23, 2
      %p114 = por %p112, %p113
      %p116 = scmp.ne.s32.totalorder %s99, %s115
      %p117 = scmp.eq.s32.totalorder %s23, 0
      %p118 = por %p116, %p117
      %p119 = scmp.le.s32.totalorder 1, %s17
      %p120 = scmp.lt.s32.totalorder %s17, 4
      %p121 = pnand %p119, %p120
      %p122 = pneg %p121
      // Predicated region
      $region9: #{tpu_custom_call.1} parent=5 // pred_check
        _
      $region10: #{tpu_custom_call.1} parent=5 // pred_check_branch
        %124 = sbr.rel (%p121) target = $region12
      $region11: #{tpu_custom_call.1} parent=5 // pred_region
        %s125 = ssub.s32 %s17, 1
        // Predicated region
        $region13: #{tpu_custom_call.1} parent=11 // pred_check
          %p126 = pneg %p38
        $region14: #{tpu_custom_call.1} parent=11 // pred_check_branch
          %128 = sbr.rel (%p126) target = $region16
        $region15: #{tpu_custom_call.1} parent=11 // pred_region
          _
        $region16: #{tpu_custom_call.1} parent=11 // pred_fallthru
          _
        // Predicated region
        $region17: #{tpu_custom_call.1} parent=11 // pred_check
          %p129 = pneg %p59
        $region18: #{tpu_custom_call.1} parent=11 // pred_check_branch
          %131 = sbr.rel (%p129) target = $region20
        $region19: #{tpu_custom_call.1} parent=11 // pred_region
          _
        $region20: #{tpu_custom_call.1} parent=11 // pred_fallthru
          _
      $region12: #{tpu_custom_call.1} parent=5 // pred_fallthru
        _
      %p132 = scmp.lt.s32.totalorder %s17, 3
      // Predicated region
      $region21: #{tpu_custom_call.1} parent=5 // pred_check
        %p133 = pneg %p132
      $region22: #{tpu_custom_call.1} parent=5 // pred_check_branch
        %135 = sbr.rel (%p133) target = $region24
      $region23: #{tpu_custom_call.1} parent=5 // pred_region
        // Predicated region
        $region25: #{tpu_custom_call.1} parent=23 // pred_check
          %p136 = pneg %p79
        $region26: #{tpu_custom_call.1} parent=23 // pred_check_branch
          %138 = sbr.rel (%p136) target = $region28
        $region27: #{tpu_custom_call.1} parent=23 // pred_region
          %s139 = sand.u32 %s69, 1
          %s140 = scalar_lea.sflag [#allocation5], %s139
          %s141 = sand.u32 %s69, 1
          %s142 = smul.addr %s141, 192
          %s143 = scalar_lea.vmem [#allocation4], %s142
          %s144 = smul.u32 3, %s17
          %146 = vsyncadd %s140, 0
          %s147 = smul.addr %s144, 8
          %s148 = smul.addr %s147, 8
          %s149 = scalar_lea.hbm %s2, %s148
          %s150 = sshll.u32 %s149, 4
          %s151 = int_to_ptr.hbm [resolvable:$true] %s150
          %s152 = sshll.u32 %s143, 4
          %s153 = int_to_ptr.vmem [resolvable:$true] %s152
          %158 = dma.hbm_to_vmem [thread:$0]  %s151, 3072, %s153, %s140, 1024, 1024, 64
        $region28: #{tpu_custom_call.1} parent=23 // pred_fallthru
          _
      $region24: #{tpu_custom_call.1} parent=5 // pred_fallthru
        _
      %p159 = scmp.le.s32.totalorder 1, %s17
      %p160 = scmp.lt.s32.totalorder %s17, 4
      %p161 = pnand %p159, %p160
      %p162 = pneg %p161
      // Predicated region
      $region29: #{tpu_custom_call.1} parent=5 // pred_check
        _
      $region30: #{tpu_custom_call.1} parent=5 // pred_check_branch
        %164 = sbr.rel (%p161) target = $region32
      $region31: #{tpu_custom_call.1} parent=5 // pred_region
        %s165 = ssub.s32 %s17, 1
        %s166 = sand.u32 %s72, 1
        %s167 = scalar_lea.sflag [#allocation5], %s166
        %s168 = sand.u32 %s72, 1
        %s169 = smul.addr %s168, 192
        %s170 = scalar_lea.vmem [#allocation4], %s169
        // Predicated region
        $region33: #{tpu_custom_call.1} parent=31 // pred_check
          %p171 = pneg %p85
        $region34: #{tpu_custom_call.1} parent=31 // pred_check_branch
          %173 = sbr.rel (%p171) target = $region36
        $region35: #{tpu_custom_call.1} parent=31 // pred_region
          %175 = dma.done %s167, 3072
        $region36: #{tpu_custom_call.1} parent=31 // pred_fallthru
          _
        %p176 = pneg %p38
        %p177 = pneg %p35
        %p178 = pneg %p59
        %p179 = pneg %p56
        %s180 = sand.u32 %s72, 1
        %s181 = scalar_lea.sflag [#allocation5], %s180
        %s182 = sand.u32 %s72, 1
        %s183 = smul.addr %s182, 192
        %s184 = scalar_lea.vmem [#allocation4], %s183
        %p185 = pneg %p85
        %p186 = pneg %p82
        %p187 = pneg %p111
        %p188 = pneg %p108
        %s189 = sand.u32 %s98, 1
        %s190 = scalar_lea.sflag [#allocation6], %s189
        %s191 = sand.u32 %s98, 1
        %s192 = smul.addr %s191, 192
        %s193 = scalar_lea.vmem [#allocation7], %s192
        %s194 = smul.u32 3, %s22
        %s195 = smul.u32 3, %s22
        %v196 = vld [vmem:[%s170] sm:$0xff]
        %v197 = vld [vmem:[%s170 + $0x8] sm:$0xff]
        %v198 = vld [vmem:[%s170 + $0x10] sm:$0xff]
        %v199 = vld [vmem:[%s170 + $0x18] sm:$0xff]
        %v200 = vld [vmem:[%s170 + $0x20] sm:$0xff]
        %v201 = vld [vmem:[%s170 + $0x28] sm:$0xff]
        %v202 = vld [vmem:[%s170 + $0x30] sm:$0xff]
        %v203 = vld [vmem:[%s170 + $0x38] sm:$0xff]
        %v204 = vld [vmem:[%s170 + $0x40] sm:$0xff]
        %v205 = vld [vmem:[%s170 + $0x48] sm:$0xff]
        %v206 = vld [vmem:[%s170 + $0x50] sm:$0xff]
        %v207 = vld [vmem:[%s170 + $0x58] sm:$0xff]
        %v208 = vld [vmem:[%s170 + $0x60] sm:$0xff]
        %v209 = vld [vmem:[%s170 + $0x68] sm:$0xff]
        %v210 = vld [vmem:[%s170 + $0x70] sm:$0xff]
        %v211 = vld [vmem:[%s170 + $0x78] sm:$0xff]
        %v212 = vld [vmem:[%s170 + $0x80] sm:$0xff]
        %v213 = vld [vmem:[%s170 + $0x88] sm:$0xff]
        %v214 = vld [vmem:[%s170 + $0x90] sm:$0xff]
        %v215 = vld [vmem:[%s170 + $0x98] sm:$0xff]
        %v216 = vld [vmem:[%s170 + $0xa0] sm:$0xff]
        %v217 = vld [vmem:[%s170 + $0xa8] sm:$0xff]
        %v218 = vld [vmem:[%s170 + $0xb0] sm:$0xff]
        %v219 = vld [vmem:[%s170 + $0xb8] sm:$0xff]
        %s220 = sld [smem:[#allocation2]]
        %v221 = vstv %s220
        %v222 = vmul.f32 %v196, %v221
        %v223 = vmul.f32 %v197, %v221
        %v224 = vmul.f32 %v198, %v221
        %v225 = vmul.f32 %v199, %v221
        %v226 = vmul.f32 %v200, %v221
        %v227 = vmul.f32 %v201, %v221
        %v228 = vmul.f32 %v202, %v221
        %v229 = vmul.f32 %v203, %v221
        %v230 = vmul.f32 %v204, %v221
        %v231 = vmul.f32 %v205, %v221
        %v232 = vmul.f32 %v206, %v221
        %v233 = vmul.f32 %v207, %v221
        %v234 = vmul.f32 %v208, %v221
        %v235 = vmul.f32 %v209, %v221
        %v236 = vmul.f32 %v210, %v221
        %v237 = vmul.f32 %v211, %v221
        %v238 = vmul.f32 %v212, %v221
        %v239 = vmul.f32 %v213, %v221
        %v240 = vmul.f32 %v214, %v221
        %v241 = vmul.f32 %v215, %v221
        %v242 = vmul.f32 %v216, %v221
        %v243 = vmul.f32 %v217, %v221
        %v244 = vmul.f32 %v218, %v221
        %v245 = vmul.f32 %v219, %v221
        %s246 = sld [smem:[#allocation3]]
        %v247 = vstv %s246
        %v248 = vadd.f32 %v222, %v247
        %v249 = vadd.f32 %v223, %v247
        %v250 = vadd.f32 %v224, %v247
        %v251 = vadd.f32 %v225, %v247
        %v252 = vadd.f32 %v226, %v247
        %v253 = vadd.f32 %v227, %v247
        %v254 = vadd.f32 %v228, %v247
        %v255 = vadd.f32 %v229, %v247
        %v256 = vadd.f32 %v230, %v247
        %v257 = vadd.f32 %v231, %v247
        %v258 = vadd.f32 %v232, %v247
        %v259 = vadd.f32 %v233, %v247
        %v260 = vadd.f32 %v234, %v247
        %v261 = vadd.f32 %v235, %v247
        %v262 = vadd.f32 %v236, %v247
        %v263 = vadd.f32 %v237, %v247
        %v264 = vadd.f32 %v238, %v247
        %v265 = vadd.f32 %v239, %v247
        %v266 = vadd.f32 %v240, %v247
        %v267 = vadd.f32 %v241, %v247
        %v268 = vadd.f32 %v242, %v247
        %v269 = vadd.f32 %v243, %v247
        %v270 = vadd.f32 %v244, %v247
        %v271 = vadd.f32 %v245, %v247
        %272 = vst [vmem:[%s193] sm:$0xff] %v248
        %273 = vst [vmem:[%s193 + $0x8] sm:$0xff] %v249
        %274 = vst [vmem:[%s193 + $0x10] sm:$0xff] %v250
        %275 = vst [vmem:[%s193 + $0x18] sm:$0xff] %v251
        %276 = vst [vmem:[%s193 + $0x20] sm:$0xff] %v252
        %277 = vst [vmem:[%s193 + $0x28] sm:$0xff] %v253
        %278 = vst [vmem:[%s193 + $0x30] sm:$0xff] %v254
        %279 = vst [vmem:[%s193 + $0x38] sm:$0xff] %v255
        %280 = vst [vmem:[%s193 + $0x40] sm:$0xff] %v256
        %281 = vst [vmem:[%s193 + $0x48] sm:$0xff] %v257
        %282 = vst [vmem:[%s193 + $0x50] sm:$0xff] %v258
        %283 = vst [vmem:[%s193 + $0x58] sm:$0xff] %v259
        %284 = vst [vmem:[%s193 + $0x60] sm:$0xff] %v260
        %285 = vst [vmem:[%s193 + $0x68] sm:$0xff] %v261
        %286 = vst [vmem:[%s193 + $0x70] sm:$0xff] %v262
        %287 = vst [vmem:[%s193 + $0x78] sm:$0xff] %v263
        %288 = vst [vmem:[%s193 + $0x80] sm:$0xff] %v264
        %289 = vst [vmem:[%s193 + $0x88] sm:$0xff] %v265
        %290 = vst [vmem:[%s193 + $0x90] sm:$0xff] %v266
        %291 = vst [vmem:[%s193 + $0x98] sm:$0xff] %v267
        %292 = vst [vmem:[%s193 + $0xa0] sm:$0xff] %v268
        %293 = vst [vmem:[%s193 + $0xa8] sm:$0xff] %v269
        %294 = vst [vmem:[%s193 + $0xb0] sm:$0xff] %v270
        %295 = vst [vmem:[%s193 + $0xb8] sm:$0xff] %v271
        %s296 = sand.u32 %s98, 1
        %s297 = scalar_lea.sflag [#allocation6], %s296
        %s298 = sand.u32 %s98, 1
        %s299 = smul.addr %s298, 192
        %s300 = scalar_lea.vmem [#allocation7], %s299
        // Predicated region
        $region37: #{tpu_custom_call.1} parent=31 // pred_check
          %p301 = pneg %p108
        $region38: #{tpu_custom_call.1} parent=31 // pred_check_branch
          %303 = sbr.rel (%p301) target = $region40
        $region39: #{tpu_custom_call.1} parent=31 // pred_region
          %s304 = smul.u32 3, %s22
          %306 = vsyncadd %s297, 0
          %s307 = smul.addr %s304, 8
          %s308 = smul.addr %s307, 8
          %s309 = scalar_lea.hbm %s3, %s308
          %s310 = sshll.u32 %s300, 4
          %s311 = int_to_ptr.vmem [resolvable:$true] %s310
          %s312 = sshll.u32 %s309, 4
          %s313 = int_to_ptr.hbm [resolvable:$true] %s312
          %318 = dma.vmem_to_hbm [thread:$0]  %s311, 3072, %s313, %s297, 1024, 1024, 64
        $region40: #{tpu_custom_call.1} parent=31 // pred_fallthru
          _
      $region32: #{tpu_custom_call.1} parent=5 // pred_fallthru
        _
      %p319 = scmp.le.s32.totalorder 2, %s17
      // Predicated region
      $region41: #{tpu_custom_call.1} parent=5 // pred_check
        %p320 = pneg %p319
      $region42: #{tpu_custom_call.1} parent=5 // pred_check_branch
        %322 = sbr.rel (%p320) target = $region44
      $region43: #{tpu_custom_call.1} parent=5 // pred_region
        %s323 = ssub.s32 %s17, 2
        // Predicated region
        $region45: #{tpu_custom_call.1} parent=43 // pred_check
          %p324 = pneg %p114
        $region46: #{tpu_custom_call.1} parent=43 // pred_check_branch
          %326 = sbr.rel (%p324) target = $region48
        $region47: #{tpu_custom_call.1} parent=43 // pred_region
          %s327 = sand.u32 %s99, 1
          %s328 = scalar_lea.sflag [#allocation6], %s327
          %s329 = sand.u32 %s99, 1
          %s330 = smul.addr %s329, 192
          %s331 = scalar_lea.vmem [#allocation7], %s330
          %333 = dma.done %s328, 3072
        $region48: #{tpu_custom_call.1} parent=43 // pred_fallthru
          _
      $region44: #{tpu_custom_call.1} parent=5 // pred_fallthru
        _
    $region6: #{tpu_custom_call.1} parent=1 // loop_footer
      %s21 = sadd.s32 1, %s17
    $region7: #{tpu_custom_call.1} parent=1 // loop_footer_branch
      %16 = sbr.rel target = $region3
    $region8: #{tpu_custom_call.1} parent=1 // loop_exit
      _
    %334 = vsyncpa [#allocation5], 1
    %s335 = scalar_lea.sflag [#allocation5], 1
    %336 = vsyncpa %s335, 1
    %337 = vsyncpa [#allocation6], 1
    %s338 = scalar_lea.sflag [#allocation6], 1
    %339 = vsyncpa %s338, 1

</llo_original>
